<compile_context>
chip_gen: v7x
topology: tpu7x:2x2x1
jax: 0.10.0
libtpu: 0.0.40
codegen_flags: <defaults>
</compile_context>

<pallas_src>
import math

import jax
import jax.numpy as jnp
from jax.experimental import pallas as pl
from jax.experimental.pallas import tpu as pltpu


def _round_up(v, m):
    return ((v + m - 1) // m) * m


def _tpu_defaults():
    """Best-effort generation query: (physical VMEM bytes, MXU width)."""
    vmem_bytes = None
    mxu = 256
    try:
        info = pltpu.get_tpu_info()
        vmem_bytes = int(getattr(info, "vmem_capacity_bytes", 0)) or None
        ver = getattr(info, "chip_version", None)
        name = str(getattr(ver, "name", ver) if ver is not None else "").lower()
        if "v5" in name:          # v5e: 4x128^2 MXU
            mxu = 128
    except Exception:
        pass
    if vmem_bytes is None:
        vmem_bytes = 64 << 20     # conservative fallback (v7x-sized VMEM)
    return vmem_bytes, mxu


def _make_kernel(*, alpha, theta, variant, residual, mm_dtype, x_resident, tk):
    """theta is already folded into W on the host (W' = theta * W)."""

    def _mm(v):
        return v if mm_dtype is None else v.astype(mm_dtype)

    def kernel(*refs):
        it = iter(refs)
        adj_ref = next(it)                       # (tm, tk)   adj row/col tile
        x_ref = next(it)                         # resident: (N_cols_p, F) | streamed: (tk, F)
        h0_ref = next(it)                        # (tm, F)    h0 row tile
        w_top_ref = next(it)                     # (F, F)     theta folded in
        w_bot_ref = next(it) if variant else None
        xres_ref = next(it) if residual else None
        out_ref = next(it)                       # (tm, F)
        hi_acc = next(it)                        # (tm, F)    f32 accumulator scratch

        k = pl.program_id(1)

        @pl.when(k == 0)
        def _init():
            hi_acc[...] = jnp.zeros_like(hi_acc)

        if x_resident:
            start = pl.multiple_of(k * tk, tk)
            x_tile = x_ref[pl.ds(start, tk), :]
        else:
            x_tile = x_ref[...]

        # hi += adj_tile @ x_tile   (MXU, f32 accumulation)
        hi_acc[...] += jnp.dot(adj_ref[...], x_tile,
                               preferred_element_type=jnp.float32)

        @pl.when(k == pl.num_programs(1) - 1)
        def _finalize():
            hi = hi_acc[...]
            h0 = h0_ref[...].astype(jnp.float32)
            r = (1.0 - alpha) * hi + alpha * h0
            if variant:
                # support = concat([hi, h0], 1);  support @ W == hi@W_top + h0@W_bot
                sw = (jnp.dot(_mm(hi), w_top_ref[...],
                              preferred_element_type=jnp.float32)
                      + jnp.dot(_mm(h0), w_bot_ref[...],
                                preferred_element_type=jnp.float32))
            else:
                # support == r in the non-variant path
                sw = jnp.dot(_mm(r), w_top_ref[...],
                             preferred_element_type=jnp.float32)
            out = sw + (1.0 - theta) * r          # sw == theta * (support @ W)
            if residual:
                out = out + xres_ref[...].astype(jnp.float32)
            out_ref[...] = out.astype(out_ref.dtype)

    return kernel


def graph_convolution(x, adj, h0, weight, *, lamda, alpha, l,
                      variant=False, residual=False,
                      tm=None, tk=None, matmul_dtype=jnp.bfloat16,
                      x_resident_bytes=8 << 20):
    """Pallas implementation of GraphConvolution.forward (dense adjacency).

    matmul_dtype: dtype for the MXU operands (adj/x/W).  Default bf16
    (f32 accumulation); pass None to keep the input dtype end-to-end.
    """
    N, fin = x.shape
    fout = weight.shape[1]
    assert weight.shape[0] == (2 * fin if variant else fin), "weight rows mismatch"
    # The `theta*sw + (1-theta)*r` (and residual) additions require fout == fin,
    # exactly like the PyTorch module.
    assert fout == fin, "GraphConvolution epilogue requires in_features == out_features"
    assert adj.shape == (N, N) and h0.shape == (N, fin)

    theta = math.log(lamda / l + 1.0)
    out_dtype = x.dtype

    mm_dtype = None if matmul_dtype is None else jnp.dtype(matmul_dtype)
    mm_itemsize = (jnp.dtype(out_dtype) if mm_dtype is None else mm_dtype).itemsize

    vmem_phys, mxu = _tpu_defaults()
    # v7x has 64 MiB VMEM -> keep headroom below it; v5e/v6e have 128 MiB.
    vmem_cap = (56 << 20) if vmem_phys <= (96 << 20) else (100 << 20)

    # --- tile sizing (lane-dense features, MXU-sized, generation-aware) ---
    F_p = _round_up(fin, 128)
    row_align = 16 if mm_itemsize == 2 else 8        # bf16 packs 2 rows/sublane

    auto_tm = tm is None
    if auto_tm:
        tm = 512 if mxu >= 256 else 256
    if tk is None:
        tk = 1024

    tm = min(tm, _round_up(N, row_align))
    if auto_tm and N >= 2 * row_align:
        # keep the "parallel" rows axis >= 2 blocks (feeds both v7x TensorCores)
        tm = min(tm, _round_up((N + 1) // 2, row_align))
    tm = _round_up(max(tm, row_align), row_align)
    tk = _round_up(max(min(tk, _round_up(N, 128)), 128), 128)

    # Independent row/col padding (no lcm blow-up of the N^2 adjacency).
    N_rows_p = _round_up(N, tm)
    N_cols_p = _round_up(N, tk)
    grid = (N_rows_p // tm, N_cols_p // tk)          # rows: parallel, K: arbitrary (last)

    def pad2(a, rows, cols):
        pr, pc = rows - a.shape[0], cols - a.shape[1]
        return jnp.pad(a, ((0, pr), (0, pc))) if (pr or pc) else a

    adj_p = pad2(adj, N_rows_p, N_cols_p)
    x_mm = pad2(x, N_cols_p, F_p)                    # matmul operand (may be downcast)
    h0_p = pad2(h0, N_rows_p, F_p)

    w_scaled = theta * weight.astype(jnp.float32)    # fold theta into W (in f32)
    if variant:
        w_top = pad2(w_scaled[:fin, :], F_p, F_p)    # two aligned blocks, no in-kernel slice
        w_bot = pad2(w_scaled[fin:, :], F_p, F_p)
    else:
        w_top = pad2(w_scaled, F_p, F_p)
        w_bot = None

    if mm_dtype is not None:
        adj_p = adj_p.astype(mm_dtype)
        x_mm = x_mm.astype(mm_dtype)
        w_top = w_top.astype(mm_dtype)
        if w_bot is not None:
            w_bot = w_bot.astype(mm_dtype)
    else:
        w_top = w_top.astype(out_dtype)
        if w_bot is not None:
            w_bot = w_bot.astype(out_dtype)

    # Keep x fully VMEM-resident (fetched once, constant index_map) when small;
    # otherwise stream (tk, F_p) tiles per K step.
    x_resident = (N_cols_p * F_p * mm_itemsize) <= x_resident_bytes

    in_specs = [pl.BlockSpec((tm, tk), lambda i, k: (i, k))]            # adj tile
    if x_resident:
        in_specs.append(pl.BlockSpec((N_cols_p, F_p), lambda i, k: (0, 0)))
    else:
        in_specs.append(pl.BlockSpec((tk, F_p), lambda i, k: (k, 0)))
    in_specs.append(pl.BlockSpec((tm, F_p), lambda i, k: (i, 0)))       # h0 row tile
    in_specs.append(pl.BlockSpec((F_p, F_p), lambda i, k: (0, 0)))      # W (top half if variant)
    args = [adj_p, x_mm, h0_p, w_top]
    if variant:
        in_specs.append(pl.BlockSpec((F_p, F_p), lambda i, k: (0, 0)))
        args.append(w_bot)
    if residual:
        # UN-cast padded x for the residual add (keeps full input precision
        # even when matmul operands are bf16), padded along the *row* axis.
        x_res = pad2(x, N_rows_p, F_p)
        in_specs.append(pl.BlockSpec((tm, F_p), lambda i, k: (i, 0)))
        args.append(x_res)

    # --- advisory cost estimate & explicit, generation-aware VMEM budget ---
    n_w = 2 if variant else 1
    flops = 2.0 * N_rows_p * N_cols_p * F_p + 2.0 * n_w * N_rows_p * F_p * F_p
    bytes_accessed = sum(int(a.size) * a.dtype.itemsize for a in args) \
        + N_rows_p * F_p * jnp.dtype(out_dtype).itemsize
    cost = pl.CostEstimate(flops=int(flops), transcendentals=0,
                           bytes_accessed=int(bytes_accessed))

    h0_isz = h0_p.dtype.itemsize
    out_isz = jnp.dtype(out_dtype).itemsize
    x_buf = (2 * N_cols_p * F_p * mm_itemsize) if x_resident \
        else (2 * tk * F_p * mm_itemsize)
    vmem_need = (2 * tm * tk * mm_itemsize            # adj tiles (double-buffered)
                 + x_buf                              # x (resident or streamed)
                 + 2 * tm * F_p * h0_isz              # h0 row tiles
                 + 2 * n_w * F_p * F_p * mm_itemsize  # weights (constant index)
                 + (2 * tm * F_p * out_isz if residual else 0)
                 + 2 * tm * F_p * out_isz             # output tiles
                 + tm * F_p * 4)                      # f32 accumulator scratch
    vmem_limit = int(min(vmem_cap, max(vmem_need + (4 << 20), 32 << 20)))

    kernel = _make_kernel(alpha=float(alpha), theta=float(theta),
                          variant=variant, residual=residual,
                          mm_dtype=mm_dtype, x_resident=x_resident, tk=tk)

    out_p = pl.pallas_call(
        kernel,
        out_shape=jax.ShapeDtypeStruct((N_rows_p, F_p), out_dtype),
        grid_spec=pltpu.PrefetchScalarGridSpec(
            num_scalar_prefetch=0,
            grid=grid,
            in_specs=in_specs,
            out_specs=pl.BlockSpec((tm, F_p), lambda i, k: (i, 0)),
            scratch_shapes=[pltpu.VMEM((tm, F_p), jnp.float32)],
        ),
        compiler_params=pltpu.CompilerParams(
            dimension_semantics=("parallel", "arbitrary"),
            vmem_limit_bytes=vmem_limit,
        ),
        cost_estimate=cost,
    )(*args)

    return out_p[:N, :fout]


def _reference(x, adj, h0, weight, *, lamda, alpha, l, variant, residual):
    theta = math.log(lamda / l + 1.0)
    hi = adj @ x
    if variant:
        support = jnp.concatenate([hi, h0], axis=1)
        r = (1 - alpha) * hi + alpha * h0
    else:
        support = (1 - alpha) * hi + alpha * h0
        r = support
    out = theta * (support @ weight) + (1 - theta) * r
    if residual:
        out = out + x
    return out


if __name__ == "__main__":
    lamda, alpha, layer_idx = 0.5, 0.1, 1

    def make_inputs(key, N, fin):
        k_adj, k_x, k_h0, k_w1, k_w2 = jax.random.split(key, 5)
        a = jax.random.uniform(k_adj, (N, N), dtype=jnp.float32)
        a = a + a.T + jnp.eye(N, dtype=jnp.float32)
        adj = a / jnp.sum(a, axis=1, keepdims=True)   # dense row-normalized adjacency
        x = jax.random.normal(k_x, (N, fin), dtype=jnp.float32)
        h0 = jax.random.normal(k_h0, (N, fin), dtype=jnp.float32)
        stdv = 1.0 / math.sqrt(fin)
        w_plain = jax.random.uniform(k_w1, (fin, fin), jnp.float32, -stdv, stdv)
        w_var = jax.random.uniform(k_w2, (2 * fin, fin), jnp.float32, -stdv, stdv)
        return adj, x, h0, w_plain, w_var

    key = jax.random.PRNGKey(0)
    k_big, k_small = jax.random.split(key)
    big = make_inputs(k_big, 256, 64)     # multi-K-step + multi-row-block, bf16 default
    small = make_inputs(k_small, 64, 32)  # strict f32 path

    configs = [
        # (inputs, variant, residual, extra kwargs, tolerance)
        (big, False, False, dict(tk=128), 3e-2),                          # resident x, 2 K-steps
        (big, True, True, dict(tk=128, x_resident_bytes=0), 3e-2),        # streamed x path
        (small, False, False, dict(matmul_dtype=None), 1e-4),             # exact f32
        (small, True, False, dict(matmul_dtype=None), 1e-4),              # exact f32, variant
    ]
    for (adj, x, h0, w_plain, w_var), variant, residual, kw, tol in configs:
        weight = w_var if variant else w_plain
        out = graph_convolution(x, adj, h0, weight, lamda=lamda, alpha=alpha,
                                l=layer_idx, variant=variant, residual=residual, **kw)
        out = jax.block_until_ready(out)
        ref = _reference(x, adj, h0, weight, lamda=lamda, alpha=alpha,
                         l=layer_idx, variant=variant, residual=residual)
        assert out.shape == ref.shape
        assert jnp.allclose(out, ref, atol=tol, rtol=tol), \
            f"mismatch for variant={variant}, residual={residual}, kw={kw}"

    print("KERNEL_OK")
</pallas_src>

<mosaic_0001>
module attributes {stable_mosaic.version = 11 : i64} {
  func.func @kernel(%arg0: i32, %arg1: i32, %arg2: memref<128x128xbf16, #tpu.memory_space<vmem>>, %arg3: memref<256x128xbf16, #tpu.memory_space<vmem>>, %arg4: memref<128x128xf32, #tpu.memory_space<vmem>>, %arg5: memref<128x128xbf16, #tpu.memory_space<vmem>>, %arg6: memref<128x128xf32, #tpu.memory_space<vmem>>, %arg7: memref<128x128xf32, #tpu.memory_space<vmem>>) attributes {dimension_semantics = [#tpu.dimension_semantics<parallel>, #tpu.dimension_semantics<arbitrary>], iteration_bounds = array<i64: 2, 2>, scalar_prefetch = 0 : i64, scratch_operands = 1 : i64, tpu.core_type = #tpu.core_type<tc>, window_params = [{transform_indices = @transform_0, window_bounds = array<i64: 128, 128>}, {pipeline_mode = #tpu.pipeline_mode<synchronous>, transform_indices = @transform_1, window_bounds = array<i64: 256, 128>}, {transform_indices = @transform_2, window_bounds = array<i64: 128, 128>}, {pipeline_mode = #tpu.pipeline_mode<synchronous>, transform_indices = @transform_3, window_bounds = array<i64: 128, 128>}, {transform_indices = @transform_4, window_bounds = array<i64: 128, 128>}]} {
    %c0_i32 = arith.constant 0 : i32
    %0 = arith.cmpi eq, %arg1, %c0_i32 : i32
    %1 = arith.extui %0 : i1 to i32
    %c0_i32_0 = arith.constant 0 : i32
    %2 = arith.cmpi ne, %1, %c0_i32_0 : i32
    scf.if %2 {
      %cst_8 = arith.constant 0.000000e+00 : f32
      %15 = vector.broadcast %cst_8 : f32 to vector<128x128xf32>
      %c0_9 = arith.constant 0 : index
      %c0_10 = arith.constant 0 : index
      %16 = vector.load %arg7[%c0_9, %c0_10] : memref<128x128xf32, #tpu.memory_space<vmem>>, vector<128x128xf32>
      tpu.vector_store %arg7[%c0_9, %c0_10], %15 {strides = array<i32>} : memref<128x128xf32, #tpu.memory_space<vmem>>, vector<128x128xf32>,
    } else {
    }
    %c128_i32 = arith.constant 128 : i32
    %3 = arith.muli %arg1, %c128_i32 : i32
    %4 = tpu.assume_multiple %3, 128 : i32
    %5 = arith.index_cast %4 : i32 to index
    %c0 = arith.constant 0 : index
    %6 = vector.load %arg3[%5, %c0] : memref<256x128xbf16, #tpu.memory_space<vmem>>, vector<128x128xbf16>
    %c0_1 = arith.constant 0 : index
    %c0_2 = arith.constant 0 : index
    %7 = vector.load %arg7[%c0_1, %c0_2] : memref<128x128xf32, #tpu.memory_space<vmem>>, vector<128x128xf32>
    %c0_3 = arith.constant 0 : index
    %c0_4 = arith.constant 0 : index
    %8 = vector.load %arg2[%c0_3, %c0_4] : memref<128x128xbf16, #tpu.memory_space<vmem>>, vector<128x128xbf16>
    %cst = arith.constant dense<0.000000e+00> : vector<128x128xf32>
    %9 = tpu.matmul %8, %6, %cst {dimension_numbers = #tpu.dot_dimension_numbers<[1], [0], [0], [1], [0, 0, 1, 1], [], []>} : vector<128x128xbf16>, vector<128x128xbf16>, vector<128x128xf32> -> vector<128x128xf32>
    %10 = arith.addf %7, %9 : vector<128x128xf32>
    %c0_5 = arith.constant 0 : index
    %c0_6 = arith.constant 0 : index
    %11 = vector.load %arg7[%c0_5, %c0_6] : memref<128x128xf32, #tpu.memory_space<vmem>>, vector<128x128xf32>
    tpu.vector_store %arg7[%c0_5, %c0_6], %10 {strides = array<i32>} : memref<128x128xf32, #tpu.memory_space<vmem>>, vector<128x128xf32>,
    %c1_i32 = arith.constant 1 : i32
    %12 = arith.cmpi eq, %arg1, %c1_i32 : i32
    %13 = arith.extui %12 : i1 to i32
    %c0_i32_7 = arith.constant 0 : i32
    %14 = arith.cmpi ne, %13, %c0_i32_7 : i32
    scf.if %14 {
      %c0_8 = arith.constant 0 : index
      %c0_9 = arith.constant 0 : index
      %15 = vector.load %arg7[%c0_8, %c0_9] : memref<128x128xf32, #tpu.memory_space<vmem>>, vector<128x128xf32>
      %c0_10 = arith.constant 0 : index
      %c0_11 = arith.constant 0 : index
      %16 = vector.load %arg4[%c0_10, %c0_11] : memref<128x128xf32, #tpu.memory_space<vmem>>, vector<128x128xf32>
      %cst_12 = arith.constant 0.899999976 : f32
      %17 = vector.broadcast %cst_12 : f32 to vector<128x128xf32>
      %18 = arith.mulf %17, %15 : vector<128x128xf32>
      %cst_13 = arith.constant 1.000000e-01 : f32
      %19 = vector.broadcast %cst_13 : f32 to vector<128x128xf32>
      %20 = arith.mulf %19, %16 : vector<128x128xf32>
      %21 = arith.addf %18, %20 : vector<128x128xf32>
      %22 = arith.truncf %21 : vector<128x128xf32> to vector<128x128xbf16>
      %c0_14 = arith.constant 0 : index
      %c0_15 = arith.constant 0 : index
      %23 = vector.load %arg5[%c0_14, %c0_15] : memref<128x128xbf16, #tpu.memory_space<vmem>>, vector<128x128xbf16>
      %cst_16 = arith.constant dense<0.000000e+00> : vector<128x128xf32>
      %24 = tpu.matmul %22, %23, %cst_16 {dimension_numbers = #tpu.dot_dimension_numbers<[1], [0], [0], [1], [0, 0, 1, 1], [], []>} : vector<128x128xbf16>, vector<128x128xbf16>, vector<128x128xf32> -> vector<128x128xf32>
      %cst_17 = arith.constant 0.594534874 : f32
      %25 = vector.broadcast %cst_17 : f32 to vector<128x128xf32>
      %26 = arith.mulf %25, %21 : vector<128x128xf32>
      %27 = arith.addf %24, %26 : vector<128x128xf32>
      %c0_18 = arith.constant 0 : index
      %c0_19 = arith.constant 0 : index
      %28 = vector.load %arg6[%c0_18, %c0_19] : memref<128x128xf32, #tpu.memory_space<vmem>>, vector<128x128xf32>
      tpu.vector_store %arg6[%c0_18, %c0_19], %27 {strides = array<i32>} : memref<128x128xf32, #tpu.memory_space<vmem>>, vector<128x128xf32>,
    } else {
    }
    return
  }
  func.func @transform_0(%arg0: i32, %arg1: i32) -> (i32, i32) {
    %c0_i32 = arith.constant 0 : i32
    return %arg0, %arg1 : i32, i32
  }
  func.func @transform_1(%arg0: i32, %arg1: i32) -> (i32, i32) {
    %c0_i32 = arith.constant 0 : i32
    %c0_i32_0 = arith.constant 0 : i32
    %c0_i32_1 = arith.constant 0 : i32
    return %c0_i32, %c0_i32_0 : i32, i32
  }
  func.func @transform_2(%arg0: i32, %arg1: i32) -> (i32, i32) {
    %c0_i32 = arith.constant 0 : i32
    %c0_i32_0 = arith.constant 0 : i32
    return %arg0, %c0_i32 : i32, i32
  }
  func.func @transform_3(%arg0: i32, %arg1: i32) -> (i32, i32) {
    %c0_i32 = arith.constant 0 : i32
    %c0_i32_0 = arith.constant 0 : i32
    %c0_i32_1 = arith.constant 0 : i32
    return %c0_i32, %c0_i32_0 : i32, i32
  }
  func.func @transform_4(%arg0: i32, %arg1: i32) -> (i32, i32) {
    %c0_i32 = arith.constant 0 : i32
    %c0_i32_0 = arith.constant 0 : i32
    return %arg0, %c0_i32 : i32, i32
  }
}

</mosaic_0001>

<llo_original>
// kernel: tpu_custom_call.1
$region0: #{tpu_custom_call.1}
  #allocation0 [shape = 'u32[]', space=smem, size = 0x4, offset = 0x4, fixed_abs, tag = 'smem constant byte address 0x4 - core index']
  #allocation1 [shape = 'u32[144,128]{1,0:T(1,128)}', space=vmem, size = 0x12000, scoped, tag = 'internal scratch']
  #allocation2 [shape = 'f32[128,128]{1,0:T(8,128)}', space=vmem, size = 0x10000, scoped, tag = 'scratch operand']
  %s0 = inlined_call_operand.hbm [shape: bf16[256,256], index: 0, kind: input, shape index: {}]
  %s1 = inlined_call_operand.hbm [shape: bf16[256,128], index: 1, kind: input, shape index: {}]
  %s2 = inlined_call_operand.hbm [shape: f32[256,128], index: 2, kind: input, shape index: {}]
  %s3 = inlined_call_operand.hbm [shape: bf16[128,128], index: 3, kind: input, shape index: {}]
  %s4 = inlined_call_operand.hbm [shape: f32[256,128], index: 4, kind: output, shape index: {}]
  %s5 = sld [smem:[#allocation0]]
  $region73: #{tpu_custom_call.1} parent=0
    _
  %s7 = ssub.s32 1, %s5
  %s8 = scalar_select 0, %s7, %s5
  $region1: #{tpu_custom_call.1} parent=0
    #allocation3 [shape = 'u8[65536]{0}', space=vmem, size = 0x10000, scoped, tag = 'input window, operand 0']
    #allocation4 [shape = 's32[2]{0}', space=sflag, size = 0x8, scoped, tag = 'scoped memory for tpu_custom_call.1']
    #allocation5 [shape = 's32[2]{0}', space=sflag, size = 0x8, scoped, tag = 'scoped memory for tpu_custom_call.1']
    #allocation6 [shape = 'u8[65536]{0}', space=vmem, size = 0x10000, scoped, tag = 'input window, operand 1, single buffered']
    #allocation7 [shape = 's32[1]{0}', space=sflag, size = 0x4, scoped, tag = 'scoped memory for tpu_custom_call.1']
    #allocation8 [shape = 'u8[131072]{0}', space=vmem, size = 0x20000, scoped, tag = 'input window, operand 2']
    #allocation9 [shape = 'u8[32768]{0}', space=vmem, size = 0x8000, scoped, tag = 'input window, operand 3, single buffered']
    #allocation10 [shape = 'u8[131072]{0}', space=vmem, size = 0x20000, scoped, tag = 'output window, operand 0']
    %9 = vsyncpa [#allocation4], 0
    %s10 = scalar_lea.sflag [#allocation4], 1
    %11 = vsyncpa %s10, 0
    %12 = vsyncpa [#allocation7], 0
    %13 = vsyncpa [#allocation5], 0
    %s14 = scalar_lea.sflag [#allocation5], 1
    %15 = vsyncpa %s14, 0
    loop: start=0, step=1, limit=6
    $region2: #{tpu_custom_call.1} parent=1 // loop_pre_header
      _
    $region3: #{tpu_custom_call.1} parent=1 // loop_header
      %s17 = sphi 0, %s21
      %p18 = scmp.ge.s32.totalorder %s17, 6
      %s24 = sphi 0, %s36
      %s25 = sphi 0, %s32
      %s26 = sphi 0, %s24
      %s27 = sphi 0, %s25
      %s28 = sphi 0, %s26
      %s29 = sphi 0, %s27
      %s41 = sphi 0, %s43
      %s44 = sphi 0, %s41
      %s45 = sphi 0, %s44
      %s61 = sphi 0, %s45
      %s65 = sphi 0, %s65
      %s67 = sphi 0, %s65
      %s68 = sphi 0, %s67
      %s82 = sphi 0, %s68
      %s88 = sphi 0, %s90
      %s91 = sphi 0, %s88
      %s92 = sphi 0, %s91
      %s108 = sphi 0, %s92
      %s112 = sphi 0, %s112
      %s114 = sphi 0, %s112
      %s115 = sphi 0, %s114
      %s129 = sphi 0, %s115
      %s135 = sphi 0, %s137
      %s138 = sphi 0, %s135
      %s139 = sphi 0, %s138
      %s155 = sphi 0, %s139
    $region4: #{tpu_custom_call.1} parent=1 // loop_header_branch
      %20 = sbr.rel (%p18) target = $region8
    $region5: #{tpu_custom_call.1} parent=1 // loop_body
      %s22 = ssub.s32 %s17, 1
      %s23 = ssub.s32 %s17, 2
      %s30 = sadd.s32 1, %s25
      %p31 = scmp.ge.s32.totalorder %s30, 2
      %s32 = scalar_select %p31, 0, %s30
      %s33 = sadd.s32 1, %s24
      %s34 = scalar_select %p31, %s33, %s24
      %p35 = scmp.ge.s32.totalorder %s34, 2
      %s36 = scalar_select %p35, 0, %s34
      %s37 = ssub.s32 %s24, %s36
      %s38 = ssub.s32 %s25, %s32
      %s39 = sor.u32 %s37, %s38
      %p40 = scmp.eq.s32.totalorder %s39, 0
      %s42 = sadd.s32 %s41, 1
      %s43 = scalar_select %p40, %s41, %s42
      %p46 = pneg %p40
      %p47 = scmp.eq.s32.totalorder %s17, 3
      %p48 = por %p46, %p47
      %p49 = scmp.ne.s32.totalorder %s41, %s44
      %p50 = scmp.eq.s32.totalorder %s17, 0
      %p51 = por %p49, %p50
      %p52 = scmp.ne.s32.totalorder %s41, %s44
      %p53 = scmp.eq.s32.totalorder %s22, 3
      %p54 = por %p52, %p53
      %p55 = scmp.ne.s32.totalorder %s44, %s45
      %p56 = scmp.eq.s32.totalorder %s22, 0
      %p57 = por %p55, %p56
      %p58 = scmp.ne.s32.totalorder %s44, %s45
      %p59 = scmp.eq.s32.totalorder %s23, 3
      %p60 = por %p58, %p59
      %p62 = scmp.ne.s32.totalorder %s45, %s61
      %p63 = scmp.eq.s32.totalorder %s23, 0
      %p64 = por %p62, %p63
      %s66 = sadd.s32 %s65, 1
      %p69 = scmp.eq.s32.totalorder %s17, 3
      %p70 = scmp.ne.s32.totalorder %s65, %s67
      %p71 = scmp.eq.s32.totalorder %s17, 0
      %p72 = por %p70, %p71
      %p73 = scmp.ne.s32.totalorder %s65, %s67
      %p74 = scmp.eq.s32.totalorder %s22, 3
      %p75 = por %p73, %p74
      %p76 = scmp.ne.s32.totalorder %s67, %s68
      %p77 = scmp.eq.s32.totalorder %s22, 0
      %p78 = por %p76, %p77
      %p79 = scmp.ne.s32.totalorder %s67, %s68
      %p80 = scmp.eq.s32.totalorder %s23, 3
      %p81 = por %p79, %p80
      %p83 = scmp.ne.s32.totalorder %s68, %s82
      %p84 = scmp.eq.s32.totalorder %s23, 0
      %p85 = por %p83, %p84
      %s86 = ssub.s32 %s24, %s36
      %p87 = scmp.eq.s32.totalorder %s86, 0
      %s89 = sadd.s32 %s88, 1
      %s90 = scalar_select %p87, %s88, %s89
      %p93 = pneg %p87
      %p94 = scmp.eq.s32.totalorder %s17, 3
      %p95 = por %p93, %p94
      %p96 = scmp.ne.s32.totalorder %s88, %s91
      %p97 = scmp.eq.s32.totalorder %s17, 0
      %p98 = por %p96, %p97
      %p99 = scmp.ne.s32.totalorder %s88, %s91
      %p100 = scmp.eq.s32.totalorder %s22, 3
      %p101 = por %p99, %p100
      %p102 = scmp.ne.s32.totalorder %s91, %s92
      %p103 = scmp.eq.s32.totalorder %s22, 0
      %p104 = por %p102, %p103
      %p105 = scmp.ne.s32.totalorder %s91, %s92
      %p106 = scmp.eq.s32.totalorder %s23, 3
      %p107 = por %p105, %p106
      %p109 = scmp.ne.s32.totalorder %s92, %s108
      %p110 = scmp.eq.s32.totalorder %s23, 0
      %p111 = por %p109, %p110
      %s113 = sadd.s32 %s112, 1
      %p116 = scmp.eq.s32.totalorder %s17, 3
      %p117 = scmp.ne.s32.totalorder %s112, %s114
      %p118 = scmp.eq.s32.totalorder %s17, 0
      %p119 = por %p117, %p118
      %p120 = scmp.ne.s32.totalorder %s112, %s114
      %p121 = scmp.eq.s32.totalorder %s22, 3
      %p122 = por %p120, %p121
      %p123 = scmp.ne.s32.totalorder %s114, %s115
      %p124 = scmp.eq.s32.totalorder %s22, 0
      %p125 = por %p123, %p124
      %p126 = scmp.ne.s32.totalorder %s114, %s115
      %p127 = scmp.eq.s32.totalorder %s23, 3
      %p128 = por %p126, %p127
      %p130 = scmp.ne.s32.totalorder %s115, %s129
      %p131 = scmp.eq.s32.totalorder %s23, 0
      %p132 = por %p130, %p131
      %s133 = ssub.s32 %s24, %s36
      %p134 = scmp.eq.s32.totalorder %s133, 0
      %s136 = sadd.s32 %s135, 1
      %s137 = scalar_select %p134, %s135, %s136
      %p140 = pneg %p134
      %p141 = scmp.eq.s32.totalorder %s17, 3
      %p142 = por %p140, %p141
      %p143 = scmp.ne.s32.totalorder %s135, %s138
      %p144 = scmp.eq.s32.totalorder %s17, 0
      %p145 = por %p143, %p144
      %p146 = scmp.ne.s32.totalorder %s135, %s138
      %p147 = scmp.eq.s32.totalorder %s22, 3
      %p148 = por %p146, %p147
      %p149 = scmp.ne.s32.totalorder %s138, %s139
      %p150 = scmp.eq.s32.totalorder %s22, 0
      %p151 = por %p149, %p150
      %p152 = scmp.ne.s32.totalorder %s138, %s139
      %p153 = scmp.eq.s32.totalorder %s23, 3
      %p154 = por %p152, %p153
      %p156 = scmp.ne.s32.totalorder %s139, %s155
      %p157 = scmp.eq.s32.totalorder %s23, 0
      %p158 = por %p156, %p157
      %p159 = scmp.le.s32.totalorder 1, %s17
      %p160 = scmp.lt.s32.totalorder %s17, 5
      %p161 = pnand %p159, %p160
      %p162 = pneg %p161
      // Predicated region
      $region9: #{tpu_custom_call.1} parent=5 // pred_check
        _
      $region10: #{tpu_custom_call.1} parent=5 // pred_check_branch
        %164 = sbr.rel (%p161) target = $region12
      $region11: #{tpu_custom_call.1} parent=5 // pred_region
        %s165 = ssub.s32 %s17, 1
        // Predicated region
        $region13: #{tpu_custom_call.1} parent=11 // pred_check
          %p166 = pneg %p78
        $region14: #{tpu_custom_call.1} parent=11 // pred_check_branch
          %168 = sbr.rel (%p166) target = $region16
        $region15: #{tpu_custom_call.1} parent=11 // pred_region
          %s170 = ssub.s32 2048, 2048
          %171 = vsyncadd [#allocation7], %s170
          %s172 = sshll.u32 [#allocation6], 4
          %s173 = int_to_ptr.vmem [resolvable:$true] %s172
          %178 = dma.hbm_to_vmem [thread:$0]  %s1, 2048, %s173, [#allocation7], 64, 64, 4
        $region16: #{tpu_custom_call.1} parent=11 // pred_fallthru
          _
        // Predicated region
        $region17: #{tpu_custom_call.1} parent=11 // pred_check
          %p179 = pneg %p125
        $region18: #{tpu_custom_call.1} parent=11 // pred_check_branch
          %181 = sbr.rel (%p179) target = $region20
        $region19: #{tpu_custom_call.1} parent=11 // pred_region
          %s183 = ssub.s32 1024, 1024
          %184 = vsyncadd [#allocation7], %s183
          %s185 = sshll.u32 [#allocation9], 4
          %s186 = int_to_ptr.vmem [resolvable:$true] %s185
          %191 = dma.hbm_to_vmem [thread:$0]  %s3, 1024, %s186, [#allocation7], 64, 64, 4
        $region20: #{tpu_custom_call.1} parent=11 // pred_fallthru
          _
      $region12: #{tpu_custom_call.1} parent=5 // pred_fallthru
        _
      %p192 = scmp.lt.s32.totalorder %s17, 4
      // Predicated region
      $region21: #{tpu_custom_call.1} parent=5 // pred_check
        %p193 = pneg %p192
      $region22: #{tpu_custom_call.1} parent=5 // pred_check_branch
        %195 = sbr.rel (%p193) target = $region24
      $region23: #{tpu_custom_call.1} parent=5 // pred_region
        // Predicated region
        $region25: #{tpu_custom_call.1} parent=23 // pred_check
          %p196 = pneg %p51
        $region26: #{tpu_custom_call.1} parent=23 // pred_check_branch
          %198 = sbr.rel (%p196) target = $region28
        $region27: #{tpu_custom_call.1} parent=23 // pred_region
          %s199 = sand.u32 %s17, 1
          %s200 = scalar_lea.sflag [#allocation4], %s199
          %s201 = sand.u32 %s41, 1
          %s202 = smul.addr %s201, 64
          %s203 = scalar_lea.vmem [#allocation3], %s202
          %s204 = smul.u32 16, %s24
          %s206 = ssub.s32 1024, 1024
          %207 = vsyncadd %s200, %s206
          %s208 = smul.addr %s204, 2
          %s209 = sadd.s32 %s25, %s208
          %s210 = smul.addr %s209, 64
          %s211 = scalar_lea.hbm %s0, %s210
          %s212 = sshll.u32 %s203, 4
          %s213 = int_to_ptr.vmem [resolvable:$true] %s212
          %218 = dma.hbm_to_vmem [thread:$0]  %s211, 1024, %s213, %s200, 128, 64, 4
        $region28: #{tpu_custom_call.1} parent=23 // pred_fallthru
          _
        // Predicated region
        $region29: #{tpu_custom_call.1} parent=23 // pred_check
          %p219 = pneg %p98
        $region30: #{tpu_custom_call.1} parent=23 // pred_check_branch
          %221 = sbr.rel (%p219) target = $region32
        $region31: #{tpu_custom_call.1} parent=23 // pred_region
          %s222 = sand.u32 %s17, 1
          %s223 = scalar_lea.sflag [#allocation4], %s222
          %s224 = sand.u32 %s88, 1
          %s225 = smul.addr %s224, 128
          %s226 = scalar_lea.vmem [#allocation8], %s225
          %s227 = smul.u32 16, %s24
          %s229 = ssub.s32 2048, 2048
          %230 = vsyncadd %s223, %s229
          %s231 = smul.addr %s227, 128
          %s232 = scalar_lea.hbm %s2, %s231
          %s233 = sshll.u32 %s226, 4
          %s234 = int_to_ptr.vmem [resolvable:$true] %s233
          %239 = dma.hbm_to_vmem [thread:$0]  %s232, 2048, %s234, %s223, 128, 128, 8
        $region32: #{tpu_custom_call.1} parent=23 // pred_fallthru
          _
      $region24: #{tpu_custom_call.1} parent=5 // pred_fallthru
        _
      %p240 = scmp.le.s32.totalorder 1, %s17
      %p241 = scmp.lt.s32.totalorder %s17, 5
      %p242 = pnand %p240, %p241
      %p243 = pneg %p242
      // Predicated region
      $region33: #{tpu_custom_call.1} parent=5 // pred_check
        _
      $region34: #{tpu_custom_call.1} parent=5 // pred_check_branch
        %245 = sbr.rel (%p242) target = $region36
      $region35: #{tpu_custom_call.1} parent=5 // pred_region
        %s246 = ssub.s32 %s17, 1
        %s247 = sand.u32 %s22, 1
        %s248 = scalar_lea.sflag [#allocation4], %s247
        %s249 = sand.u32 %s44, 1
        %s250 = smul.addr %s249, 64
        %s251 = scalar_lea.vmem [#allocation3], %s250
        // Predicated region
        $region37: #{tpu_custom_call.1} parent=35 // pred_check
          %p252 = pneg %p57
        $region38: #{tpu_custom_call.1} parent=35 // pred_check_branch
          %254 = sbr.rel (%p252) target = $region40
        $region39: #{tpu_custom_call.1} parent=35 // pred_region
          %255 = dma.done %s248, 1024
        $region40: #{tpu_custom_call.1} parent=35 // pred_fallthru
          _
        // Predicated region
        $region41: #{tpu_custom_call.1} parent=35 // pred_check
          %p256 = pneg %p78
        $region42: #{tpu_custom_call.1} parent=35 // pred_check_branch
          %258 = sbr.rel (%p256) target = $region44
        $region43: #{tpu_custom_call.1} parent=35 // pred_region
          %259 = dma.done [#allocation7], 2048
        $region44: #{tpu_custom_call.1} parent=35 // pred_fallthru
          _
        %s260 = sand.u32 %s22, 1
        %s261 = scalar_lea.sflag [#allocation4], %s260
        %s262 = sand.u32 %s91, 1
        %s263 = smul.addr %s262, 128
        %s264 = scalar_lea.vmem [#allocation8], %s263
        // Predicated region
        $region45: #{tpu_custom_call.1} parent=35 // pred_check
          %p265 = pneg %p104
        $region46: #{tpu_custom_call.1} parent=35 // pred_check_branch
          %267 = sbr.rel (%p265) target = $region48
        $region47: #{tpu_custom_call.1} parent=35 // pred_region
          %268 = dma.done %s261, 2048
        $region48: #{tpu_custom_call.1} parent=35 // pred_fallthru
          _
        // Predicated region
        $region49: #{tpu_custom_call.1} parent=35 // pred_check
          %p269 = pneg %p125
        $region50: #{tpu_custom_call.1} parent=35 // pred_check_branch
          %271 = sbr.rel (%p269) target = $region52
        $region51: #{tpu_custom_call.1} parent=35 // pred_region
          %272 = dma.done [#allocation7], 1024
        $region52: #{tpu_custom_call.1} parent=35 // pred_fallthru
          _
        %s273 = sand.u32 %s22, 1
        %s274 = scalar_lea.sflag [#allocation4], %s273
        %s275 = sand.u32 %s44, 1
        %s276 = smul.addr %s275, 64
        %s277 = scalar_lea.vmem [#allocation3], %s276
        %p278 = pneg %p57
        %p279 = pneg %p54
        %p280 = pneg %p78
        %p281 = pneg %p75
        %s282 = sand.u32 %s22, 1
        %s283 = scalar_lea.sflag [#allocation4], %s282
        %s284 = sand.u32 %s91, 1
        %s285 = smul.addr %s284, 128
        %s286 = scalar_lea.vmem [#allocation8], %s285
        %p287 = pneg %p104
        %p288 = pneg %p101
        %p289 = pneg %p125
        %p290 = pneg %p122
        %p291 = pneg %p151
        %p292 = pneg %p148
        %s293 = sand.u32 %s138, 1
        %s294 = scalar_lea.sflag [#allocation5], %s293
        %s295 = sand.u32 %s138, 1
        %s296 = smul.addr %s295, 128
        %s297 = scalar_lea.vmem [#allocation10], %s296
        %s298 = smul.u32 16, %s26
        %s299 = smul.u32 16, %s26
        %s300 = smul.u32 16, %s26
        %p302 = scmp.eq.s32.totalorder %s27, 0
        // Predicated region
        $region53: #{tpu_custom_call.1} parent=35 // pred_check
          %p303 = pneg %p302
        $region54: #{tpu_custom_call.1} parent=35 // pred_check_branch
          %305 = sbr.rel (%p303) target = $region56
        $region55: #{tpu_custom_call.1} parent=35 // pred_region
          %306 = vst [vmem:[#allocation2] sm:$0xff] 0.0
          %307 = vst [vmem:[#allocation2 + $0x8] sm:$0xff] 0.0
          %308 = vst [vmem:[#allocation2 + $0x10] sm:$0xff] 0.0
          %309 = vst [vmem:[#allocation2 + $0x18] sm:$0xff] 0.0
          %310 = vst [vmem:[#allocation2 + $0x20] sm:$0xff] 0.0
          %311 = vst [vmem:[#allocation2 + $0x28] sm:$0xff] 0.0
          %312 = vst [vmem:[#allocation2 + $0x30] sm:$0xff] 0.0
          %313 = vst [vmem:[#allocation2 + $0x38] sm:$0xff] 0.0
          %314 = vst [vmem:[#allocation2 + $0x40] sm:$0xff] 0.0
          %315 = vst [vmem:[#allocation2 + $0x48] sm:$0xff] 0.0
          %316 = vst [vmem:[#allocation2 + $0x50] sm:$0xff] 0.0
          %317 = vst [vmem:[#allocation2 + $0x58] sm:$0xff] 0.0
          %318 = vst [vmem:[#allocation2 + $0x60] sm:$0xff] 0.0
          %319 = vst [vmem:[#allocation2 + $0x68] sm:$0xff] 0.0
          %320 = vst [vmem:[#allocation2 + $0x70] sm:$0xff] 0.0
          %321 = vst [vmem:[#allocation2 + $0x78] sm:$0xff] 0.0
        $region56: #{tpu_custom_call.1} parent=35 // pred_fallthru
          _
        %s322 = smul.u32 %s27, 128
        %s323 = sshra.s32 %s322, 3
        %s324 = sand.u32 %s322, 7
        %s325 = smul.addr %s323, 4
        %s326 = scalar_lea.vmem [#allocation6], %s325
        %v327 = vld [vmem:[%s326] sm:$0xf]
        %v328 = vld [vmem:[%s326 + $0x4] sm:$0xf]
        %v329 = vld [vmem:[%s326 + $0x8] sm:$0xf]
        %v330 = vld [vmem:[%s326 + $0xc] sm:$0xf]
        %v331 = vld [vmem:[%s326 + $0x10] sm:$0xf]
        %v332 = vld [vmem:[%s326 + $0x14] sm:$0xf]
        %v333 = vld [vmem:[%s326 + $0x18] sm:$0xf]
        %v334 = vld [vmem:[%s326 + $0x1c] sm:$0xf]
        %v335 = vld [vmem:[%s326 + $0x20] sm:$0xf]
        %v336 = vld [vmem:[%s326 + $0x24] sm:$0xf]
        %v337 = vld [vmem:[%s326 + $0x28] sm:$0xf]
        %v338 = vld [vmem:[%s326 + $0x2c] sm:$0xf]
        %v339 = vld [vmem:[%s326 + $0x30] sm:$0xf]
        %v340 = vld [vmem:[%s326 + $0x34] sm:$0xf]
        %v341 = vld [vmem:[%s326 + $0x38] sm:$0xf]
        %v342 = vld [vmem:[%s326 + $0x3c] sm:$0xf]
        %v343 = vld [vmem:[#allocation2] sm:$0xff]
        %v344 = vld [vmem:[#allocation2 + $0x8] sm:$0xff]
        %v345 = vld [vmem:[#allocation2 + $0x10] sm:$0xff]
        %v346 = vld [vmem:[#allocation2 + $0x18] sm:$0xff]
        %v347 = vld [vmem:[#allocation2 + $0x20] sm:$0xff]
        %v348 = vld [vmem:[#allocation2 + $0x28] sm:$0xff]
        %v349 = vld [vmem:[#allocation2 + $0x30] sm:$0xff]
        %v350 = vld [vmem:[#allocation2 + $0x38] sm:$0xff]
        %v351 = vld [vmem:[#allocation2 + $0x40] sm:$0xff]
        %v352 = vld [vmem:[#allocation2 + $0x48] sm:$0xff]
        %v353 = vld [vmem:[#allocation2 + $0x50] sm:$0xff]
        %v354 = vld [vmem:[#allocation2 + $0x58] sm:$0xff]
        %v355 = vld [vmem:[#allocation2 + $0x60] sm:$0xff]
        %v356 = vld [vmem:[#allocation2 + $0x68] sm:$0xff]
        %v357 = vld [vmem:[#allocation2 + $0x70] sm:$0xff]
        %v358 = vld [vmem:[#allocation2 + $0x78] sm:$0xff]
        %v359 = vld [vmem:[%s251] sm:$0xf]
        %v360 = vld [vmem:[%s251 + $0x4] sm:$0xf]
        %v361 = vld [vmem:[%s251 + $0x8] sm:$0xf]
        %v362 = vld [vmem:[%s251 + $0xc] sm:$0xf]
        %v363 = vld [vmem:[%s251 + $0x10] sm:$0xf]
        %v364 = vld [vmem:[%s251 + $0x14] sm:$0xf]
        %v365 = vld [vmem:[%s251 + $0x18] sm:$0xf]
        %v366 = vld [vmem:[%s251 + $0x1c] sm:$0xf]
        %v367 = vld [vmem:[%s251 + $0x20] sm:$0xf]
        %v368 = vld [vmem:[%s251 + $0x24] sm:$0xf]
        %v369 = vld [vmem:[%s251 + $0x28] sm:$0xf]
        %v370 = vld [vmem:[%s251 + $0x2c] sm:$0xf]
        %v371 = vld [vmem:[%s251 + $0x30] sm:$0xf]
        %v372 = vld [vmem:[%s251 + $0x34] sm:$0xf]
        %v373 = vld [vmem:[%s251 + $0x38] sm:$0xf]
        %v374 = vld [vmem:[%s251 + $0x3c] sm:$0xf]
        %v391 = vunpack.c.l.b16 %v359
        %v392 = vunpack.c.l.b16 %v360
        %v393 = vunpack.c.l.b16 %v361
        %v394 = vunpack.c.l.b16 %v362
        %v395 = vunpack.c.l.b16 %v363
        %v396 = vunpack.c.l.b16 %v364
        %v397 = vunpack.c.l.b16 %v365
        %v398 = vunpack.c.l.b16 %v366
        %v399 = vunpack.c.l.b16 %v367
        %v400 = vunpack.c.l.b16 %v368
        %v401 = vunpack.c.l.b16 %v369
        %v402 = vunpack.c.l.b16 %v370
        %v403 = vunpack.c.l.b16 %v371
        %v404 = vunpack.c.l.b16 %v372
        %v405 = vunpack.c.l.b16 %v373
        %v406 = vunpack.c.l.b16 %v374
        %v407 = vpack.c.b16 %v392, %v391
        %v408 = vpack.c.b16 %v394, %v393
        %v409 = vpack.c.b16 %v396, %v395
        %v410 = vpack.c.b16 %v398, %v397
        %v411 = vpack.c.b16 %v400, %v399
        %v412 = vpack.c.b16 %v402, %v401
        %v413 = vpack.c.b16 %v404, %v403
        %v414 = vpack.c.b16 %v406, %v405
        %v439 = vunpack.c.l.b16 %v327
        %v440 = vunpack.c.l.b16 %v328
        %v441 = vunpack.c.l.b16 %v329
        %v442 = vunpack.c.l.b16 %v330
        %v443 = vunpack.c.l.b16 %v331
        %v444 = vunpack.c.l.b16 %v332
        %v445 = vunpack.c.l.b16 %v333
        %v446 = vunpack.c.l.b16 %v334
        %v447 = vunpack.c.l.b16 %v335
        %v448 = vunpack.c.l.b16 %v336
        %v449 = vunpack.c.l.b16 %v337
        %v450 = vunpack.c.l.b16 %v338
        %v451 = vunpack.c.l.b16 %v339
        %v452 = vunpack.c.l.b16 %v340
        %v453 = vunpack.c.l.b16 %v341
        %v454 = vunpack.c.l.b16 %v342
        %v455 = vpack.c.b16 %v440, %v439
        %v456 = vpack.c.b16 %v442, %v441
        %v457 = vpack.c.b16 %v444, %v443
        %v458 = vpack.c.b16 %v446, %v445
        %v459 = vpack.c.b16 %v448, %v447
        %v460 = vpack.c.b16 %v450, %v449
        %v461 = vpack.c.b16 %v452, %v451
        %v462 = vpack.c.b16 %v454, %v453
        %471 = vmatprep.subr.bf16.mxu0 0
        %472 = vmatpush1.bf16.msra.mxu0 %v455
        %473 = vmatprep.subr.bf16.mxu0 0
        %474 = vmatpush1.bf16.msra.mxu0 %v456
        %475 = vmatprep.subr.bf16.mxu0 0
        %476 = vmatpush1.bf16.msra.mxu0 %v457
        %477 = vmatprep.subr.bf16.mxu0 0
        %478 = vmatpush1.bf16.msra.mxu0 %v458
        %479 = vmatprep.subr.bf16.mxu0 0
        %480 = vmatpush1.bf16.msra.mxu0 %v459
        %481 = vmatprep.subr.bf16.mxu0 0
        %482 = vmatpush1.bf16.msra.mxu0 %v460
        %483 = vmatprep.subr.bf16.mxu0 0
        %484 = vmatpush1.bf16.msra.mxu0 %v461
        %485 = vmatprep.subr.bf16.mxu0 0
        %486 = vmatpush1.bf16.msra.mxu0 %v462
        %487 = vmatprep.subr.bf16.mxu0 0
        %488 = vmatpush1.bf16.msra.mxu0 0
        %489 = vmatprep.subr.bf16.mxu0 0
        %490 = vmatpush1.bf16.msra.mxu0 0
        %491 = vmatprep.subr.bf16.mxu0 0
        %492 = vmatpush1.bf16.msra.mxu0 0
        %493 = vmatprep.subr.bf16.mxu0 0
        %494 = vmatpush1.bf16.msra.mxu0 0
        %495 = vmatprep.subr.bf16.mxu0 0
        %496 = vmatpush1.bf16.msra.mxu0 0
        %497 = vmatprep.subr.bf16.mxu0 0
        %498 = vmatpush1.bf16.msra.mxu0 0
        %499 = vmatprep.subr.bf16.mxu0 0
        %500 = vmatpush1.bf16.msra.mxu0 0
        %501 = vmatprep.subr.bf16.mxu0 0
        %502 = vmatpush1.bf16.msra.mxu0 0
        %503 = vmatprep.mubr.bf16.mxu0 0
        %504 = vmatmul.mubr.bf16.gmra.mrb[0].mxu0 %v407
        %v505 = vpop.f32.mrb[0].mxu0
        %v506 = vadd.f32 0.0, %v505
        %v507 = vpop.f32.mrb[0].mxu0
        %v508 = vpop.f32.mrb[0].mxu0
        %v509 = vadd.f32 0.0, %v508
        %v510 = vpop.f32.mrb[0].mxu0
        %511 = vmatprep.mubr.bf16.mxu0 0
        %512 = vmatmul.mubr.bf16.gmra.mrb[0].mxu0 %v408
        %v513 = vpop.f32.mrb[0].mxu0
        %v514 = vadd.f32 0.0, %v513
        %v515 = vpop.f32.mrb[0].mxu0
        %v516 = vpop.f32.mrb[0].mxu0
        %v517 = vadd.f32 0.0, %v516
        %v518 = vpop.f32.mrb[0].mxu0
        %519 = vmatprep.mubr.bf16.mxu0 0
        %520 = vmatmul.mubr.bf16.gmra.mrb[0].mxu0 %v409
        %v521 = vpop.f32.mrb[0].mxu0
        %v522 = vadd.f32 0.0, %v521
        %v523 = vpop.f32.mrb[0].mxu0
        %v524 = vpop.f32.mrb[0].mxu0
        %v525 = vadd.f32 0.0, %v524
        %v526 = vpop.f32.mrb[0].mxu0
        %527 = vmatprep.mubr.bf16.mxu0 0
        %528 = vmatmul.mubr.bf16.gmra.mrb[0].mxu0 %v410
        %v529 = vpop.f32.mrb[0].mxu0
        %v530 = vadd.f32 0.0, %v529
        %v531 = vpop.f32.mrb[0].mxu0
        %v532 = vpop.f32.mrb[0].mxu0
        %v533 = vadd.f32 0.0, %v532
        %v534 = vpop.f32.mrb[0].mxu0
        %535 = vmatprep.mubr.bf16.mxu0 0
        %536 = vmatmul.mubr.bf16.gmra.mrb[0].mxu0 %v411
        %v537 = vpop.f32.mrb[0].mxu0
        %v538 = vadd.f32 0.0, %v537
        %v539 = vpop.f32.mrb[0].mxu0
        %v540 = vpop.f32.mrb[0].mxu0
        %v541 = vadd.f32 0.0, %v540
        %v542 = vpop.f32.mrb[0].mxu0
        %543 = vmatprep.mubr.bf16.mxu0 0
        %544 = vmatmul.mubr.bf16.gmra.mrb[0].mxu0 %v412
        %v545 = vpop.f32.mrb[0].mxu0
        %v546 = vadd.f32 0.0, %v545
        %v547 = vpop.f32.mrb[0].mxu0
        %v548 = vpop.f32.mrb[0].mxu0
        %v549 = vadd.f32 0.0, %v548
        %v550 = vpop.f32.mrb[0].mxu0
        %551 = vmatprep.mubr.bf16.mxu0 0
        %552 = vmatmul.mubr.bf16.gmra.mrb[0].mxu0 %v413
        %v553 = vpop.f32.mrb[0].mxu0
        %v554 = vadd.f32 0.0, %v553
        %v555 = vpop.f32.mrb[0].mxu0
        %v556 = vpop.f32.mrb[0].mxu0
        %v557 = vadd.f32 0.0, %v556
        %v558 = vpop.f32.mrb[0].mxu0
        %559 = vmatprep.mubr.bf16.mxu0 0
        %560 = vmatmul.mubr.bf16.gmra.mrb[0].mxu0 %v414
        %v561 = vpop.f32.mrb[0].mxu0
        %v562 = vadd.f32 0.0, %v561
        %v563 = vpop.f32.mrb[0].mxu0
        %v564 = vpop.f32.mrb[0].mxu0
        %v565 = vadd.f32 0.0, %v564
        %v566 = vpop.f32.mrb[0].mxu0
        %567 = vdwg.mxu0
        %v568 = vadd.f32 %v343, %v506
        %v569 = vadd.f32 %v344, %v509
        %v570 = vadd.f32 %v345, %v514
        %v571 = vadd.f32 %v346, %v517
        %v572 = vadd.f32 %v347, %v522
        %v573 = vadd.f32 %v348, %v525
        %v574 = vadd.f32 %v349, %v530
        %v575 = vadd.f32 %v350, %v533
        %v576 = vadd.f32 %v351, %v538
        %v577 = vadd.f32 %v352, %v541
        %v578 = vadd.f32 %v353, %v546
        %v579 = vadd.f32 %v354, %v549
        %v580 = vadd.f32 %v355, %v554
        %v581 = vadd.f32 %v356, %v557
        %v582 = vadd.f32 %v357, %v562
        %v583 = vadd.f32 %v358, %v565
        %584 = vst [vmem:[#allocation2] sm:$0xff] %v568
        %585 = vst [vmem:[#allocation2 + $0x8] sm:$0xff] %v569
        %586 = vst [vmem:[#allocation2 + $0x10] sm:$0xff] %v570
        %587 = vst [vmem:[#allocation2 + $0x18] sm:$0xff] %v571
        %588 = vst [vmem:[#allocation2 + $0x20] sm:$0xff] %v572
        %589 = vst [vmem:[#allocation2 + $0x28] sm:$0xff] %v573
        %590 = vst [vmem:[#allocation2 + $0x30] sm:$0xff] %v574
        %591 = vst [vmem:[#allocation2 + $0x38] sm:$0xff] %v575
        %592 = vst [vmem:[#allocation2 + $0x40] sm:$0xff] %v576
        %593 = vst [vmem:[#allocation2 + $0x48] sm:$0xff] %v577
        %594 = vst [vmem:[#allocation2 + $0x50] sm:$0xff] %v578
        %595 = vst [vmem:[#allocation2 + $0x58] sm:$0xff] %v579
        %596 = vst [vmem:[#allocation2 + $0x60] sm:$0xff] %v580
        %597 = vst [vmem:[#allocation2 + $0x68] sm:$0xff] %v581
        %598 = vst [vmem:[#allocation2 + $0x70] sm:$0xff] %v582
        %599 = vst [vmem:[#allocation2 + $0x78] sm:$0xff] %v583
        %p600 = scmp.eq.s32.totalorder %s27, 1
        // Predicated region
        $region57: #{tpu_custom_call.1} parent=35 // pred_check
          %p601 = pneg %p600
        $region58: #{tpu_custom_call.1} parent=35 // pred_check_branch
          %603 = sbr.rel (%p601) target = $region60
        $region59: #{tpu_custom_call.1} parent=35 // pred_region
          %v604 = vld [vmem:[#allocation2] sm:$0xff]
          %v605 = vld [vmem:[#allocation2 + $0x8] sm:$0xff]
          %v606 = vld [vmem:[#allocation2 + $0x10] sm:$0xff]
          %v607 = vld [vmem:[#allocation2 + $0x18] sm:$0xff]
          %v608 = vld [vmem:[#allocation2 + $0x20] sm:$0xff]
          %v609 = vld [vmem:[#allocation2 + $0x28] sm:$0xff]
          %v610 = vld [vmem:[#allocation2 + $0x30] sm:$0xff]
          %v611 = vld [vmem:[#allocation2 + $0x38] sm:$0xff]
          %v612 = vld [vmem:[#allocation2 + $0x40] sm:$0xff]
          %v613 = vld [vmem:[#allocation2 + $0x48] sm:$0xff]
          %v614 = vld [vmem:[#allocation2 + $0x50] sm:$0xff]
          %v615 = vld [vmem:[#allocation2 + $0x58] sm:$0xff]
          %v616 = vld [vmem:[#allocation2 + $0x60] sm:$0xff]
          %v617 = vld [vmem:[#allocation2 + $0x68] sm:$0xff]
          %v618 = vld [vmem:[#allocation2 + $0x70] sm:$0xff]
          %v619 = vld [vmem:[#allocation2 + $0x78] sm:$0xff]
          %v620 = vld [vmem:[%s264] sm:$0xff]
          %v621 = vld [vmem:[%s264 + $0x8] sm:$0xff]
          %v622 = vld [vmem:[%s264 + $0x10] sm:$0xff]
          %v623 = vld [vmem:[%s264 + $0x18] sm:$0xff]
          %v624 = vld [vmem:[%s264 + $0x20] sm:$0xff]
          %v625 = vld [vmem:[%s264 + $0x28] sm:$0xff]
          %v626 = vld [vmem:[%s264 + $0x30] sm:$0xff]
          %v627 = vld [vmem:[%s264 + $0x38] sm:$0xff]
          %v628 = vld [vmem:[%s264 + $0x40] sm:$0xff]
          %v629 = vld [vmem:[%s264 + $0x48] sm:$0xff]
          %v630 = vld [vmem:[%s264 + $0x50] sm:$0xff]
          %v631 = vld [vmem:[%s264 + $0x58] sm:$0xff]
          %v632 = vld [vmem:[%s264 + $0x60] sm:$0xff]
          %v633 = vld [vmem:[%s264 + $0x68] sm:$0xff]
          %v634 = vld [vmem:[%s264 + $0x70] sm:$0xff]
          %v635 = vld [vmem:[%s264 + $0x78] sm:$0xff]
          %v636 = vmul.f32 %v604, 0.9
          %v637 = vmul.f32 %v605, 0.9
          %v638 = vmul.f32 %v606, 0.9
          %v639 = vmul.f32 %v607, 0.9
          %v640 = vmul.f32 %v608, 0.9
          %v641 = vmul.f32 %v609, 0.9
          %v642 = vmul.f32 %v610, 0.9
          %v643 = vmul.f32 %v611, 0.9
          %v644 = vmul.f32 %v612, 0.9
          %v645 = vmul.f32 %v613, 0.9
          %v646 = vmul.f32 %v614, 0.9
          %v647 = vmul.f32 %v615, 0.9
          %v648 = vmul.f32 %v616, 0.9
          %v649 = vmul.f32 %v617, 0.9
          %v650 = vmul.f32 %v618, 0.9
          %v651 = vmul.f32 %v619, 0.9
          %v652 = vmul.f32 %v620, 0.1
          %v653 = vmul.f32 %v621, 0.1
          %v654 = vmul.f32 %v622, 0.1
          %v655 = vmul.f32 %v623, 0.1
          %v656 = vmul.f32 %v624, 0.1
          %v657 = vmul.f32 %v625, 0.1
          %v658 = vmul.f32 %v626, 0.1
          %v659 = vmul.f32 %v627, 0.1
          %v660 = vmul.f32 %v628, 0.1
          %v661 = vmul.f32 %v629, 0.1
          %v662 = vmul.f32 %v630, 0.1
          %v663 = vmul.f32 %v631, 0.1
          %v664 = vmul.f32 %v632, 0.1
          %v665 = vmul.f32 %v633, 0.1
          %v666 = vmul.f32 %v634, 0.1
          %v667 = vmul.f32 %v635, 0.1
          %v668 = vadd.f32 %v636, %v652
          %v669 = vadd.f32 %v637, %v653
          %v670 = vadd.f32 %v638, %v654
          %v671 = vadd.f32 %v639, %v655
          %v672 = vadd.f32 %v640, %v656
          %v673 = vadd.f32 %v641, %v657
          %v674 = vadd.f32 %v642, %v658
          %v675 = vadd.f32 %v643, %v659
          %v676 = vadd.f32 %v644, %v660
          %v677 = vadd.f32 %v645, %v661
          %v678 = vadd.f32 %v646, %v662
          %v679 = vadd.f32 %v647, %v663
          %v680 = vadd.f32 %v648, %v664
          %v681 = vadd.f32 %v649, %v665
          %v682 = vadd.f32 %v650, %v666
          %v683 = vadd.f32 %v651, %v667
          %v684 = vpack.c.bf16 %v669, %v668
          %v685 = vpack.c.bf16 %v671, %v670
          %v686 = vpack.c.bf16 %v673, %v672
          %v687 = vpack.c.bf16 %v675, %v674
          %v688 = vpack.c.bf16 %v677, %v676
          %v689 = vpack.c.bf16 %v679, %v678
          %v690 = vpack.c.bf16 %v681, %v680
          %v691 = vpack.c.bf16 %v683, %v682
          %v692 = vld [vmem:[#allocation9] sm:$0xf]
          %v693 = vld [vmem:[#allocation9 + $0x4] sm:$0xf]
          %v694 = vld [vmem:[#allocation9 + $0x8] sm:$0xf]
          %v695 = vld [vmem:[#allocation9 + $0xc] sm:$0xf]
          %v696 = vld [vmem:[#allocation9 + $0x10] sm:$0xf]
          %v697 = vld [vmem:[#allocation9 + $0x14] sm:$0xf]
          %v698 = vld [vmem:[#allocation9 + $0x18] sm:$0xf]
          %v699 = vld [vmem:[#allocation9 + $0x1c] sm:$0xf]
          %v700 = vld [vmem:[#allocation9 + $0x20] sm:$0xf]
          %v701 = vld [vmem:[#allocation9 + $0x24] sm:$0xf]
          %v702 = vld [vmem:[#allocation9 + $0x28] sm:$0xf]
          %v703 = vld [vmem:[#allocation9 + $0x2c] sm:$0xf]
          %v704 = vld [vmem:[#allocation9 + $0x30] sm:$0xf]
          %v705 = vld [vmem:[#allocation9 + $0x34] sm:$0xf]
          %v706 = vld [vmem:[#allocation9 + $0x38] sm:$0xf]
          %v707 = vld [vmem:[#allocation9 + $0x3c] sm:$0xf]
          %v708 = vmul.f32 %v668, 0.5945349
          %v709 = vmul.f32 %v669, 0.5945349
          %v710 = vmul.f32 %v670, 0.5945349
          %v711 = vmul.f32 %v671, 0.5945349
          %v712 = vmul.f32 %v672, 0.5945349
          %v713 = vmul.f32 %v673, 0.5945349
          %v714 = vmul.f32 %v674, 0.5945349
          %v715 = vmul.f32 %v675, 0.5945349
          %v716 = vmul.f32 %v676, 0.5945349
          %v717 = vmul.f32 %v677, 0.5945349
          %v718 = vmul.f32 %v678, 0.5945349
          %v719 = vmul.f32 %v679, 0.5945349
          %v720 = vmul.f32 %v680, 0.5945349
          %v721 = vmul.f32 %v681, 0.5945349
          %v722 = vmul.f32 %v682, 0.5945349
          %v723 = vmul.f32 %v683, 0.5945349
          %v740 = vunpack.c.l.b16 %v692
          %v741 = vunpack.c.l.b16 %v693
          %v742 = vunpack.c.l.b16 %v694
          %v743 = vunpack.c.l.b16 %v695
          %v744 = vunpack.c.l.b16 %v696
          %v745 = vunpack.c.l.b16 %v697
          %v746 = vunpack.c.l.b16 %v698
          %v747 = vunpack.c.l.b16 %v699
          %v748 = vunpack.c.l.b16 %v700
          %v749 = vunpack.c.l.b16 %v701
          %v750 = vunpack.c.l.b16 %v702
          %v751 = vunpack.c.l.b16 %v703
          %v752 = vunpack.c.l.b16 %v704
          %v753 = vunpack.c.l.b16 %v705
          %v754 = vunpack.c.l.b16 %v706
          %v755 = vunpack.c.l.b16 %v707
          %v756 = vpack.c.b16 %v741, %v740
          %v757 = vpack.c.b16 %v743, %v742
          %v758 = vpack.c.b16 %v745, %v744
          %v759 = vpack.c.b16 %v747, %v746
          %v760 = vpack.c.b16 %v749, %v748
          %v761 = vpack.c.b16 %v751, %v750
          %v762 = vpack.c.b16 %v753, %v752
          %v763 = vpack.c.b16 %v755, %v754
          %772 = vmatprep.subr.bf16.mxu0 0
          %773 = vmatpush1.bf16.msra.mxu0 %v756
          %774 = vmatprep.subr.bf16.mxu0 0
          %775 = vmatpush1.bf16.msra.mxu0 %v757
          %776 = vmatprep.subr.bf16.mxu0 0
          %777 = vmatpush1.bf16.msra.mxu0 %v758
          %778 = vmatprep.subr.bf16.mxu0 0
          %779 = vmatpush1.bf16.msra.mxu0 %v759
          %780 = vmatprep.subr.bf16.mxu0 0
          %781 = vmatpush1.bf16.msra.mxu0 %v760
          %782 = vmatprep.subr.bf16.mxu0 0
          %783 = vmatpush1.bf16.msra.mxu0 %v761
          %784 = vmatprep.subr.bf16.mxu0 0
          %785 = vmatpush1.bf16.msra.mxu0 %v762
          %786 = vmatprep.subr.bf16.mxu0 0
          %787 = vmatpush1.bf16.msra.mxu0 %v763
          %788 = vmatprep.subr.bf16.mxu0 0
          %789 = vmatpush1.bf16.msra.mxu0 0
          %790 = vmatprep.subr.bf16.mxu0 0
          %791 = vmatpush1.bf16.msra.mxu0 0
          %792 = vmatprep.subr.bf16.mxu0 0
          %793 = vmatpush1.bf16.msra.mxu0 0
          %794 = vmatprep.subr.bf16.mxu0 0
          %795 = vmatpush1.bf16.msra.mxu0 0
          %796 = vmatprep.subr.bf16.mxu0 0
          %797 = vmatpush1.bf16.msra.mxu0 0
          %798 = vmatprep.subr.bf16.mxu0 0
          %799 = vmatpush1.bf16.msra.mxu0 0
          %800 = vmatprep.subr.bf16.mxu0 0
          %801 = vmatpush1.bf16.msra.mxu0 0
          %802 = vmatprep.subr.bf16.mxu0 0
          %803 = vmatpush1.bf16.msra.mxu0 0
          %804 = vmatprep.mubr.bf16.mxu0 0
          %805 = vmatmul.mubr.bf16.gmra.mrb[0].mxu0 %v684
          %v806 = vpop.f32.mrb[0].mxu0
          %v807 = vadd.f32 %v708, %v806
          %v808 = vpop.f32.mrb[0].mxu0
          %v809 = vpop.f32.mrb[0].mxu0
          %v810 = vadd.f32 %v709, %v809
          %v811 = vpop.f32.mrb[0].mxu0
          %812 = vmatprep.mubr.bf16.mxu0 0
          %813 = vmatmul.mubr.bf16.gmra.mrb[0].mxu0 %v685
          %v814 = vpop.f32.mrb[0].mxu0
          %v815 = vadd.f32 %v710, %v814
          %v816 = vpop.f32.mrb[0].mxu0
          %v817 = vpop.f32.mrb[0].mxu0
          %v818 = vadd.f32 %v711, %v817
          %v819 = vpop.f32.mrb[0].mxu0
          %820 = vmatprep.mubr.bf16.mxu0 0
          %821 = vmatmul.mubr.bf16.gmra.mrb[0].mxu0 %v686
          %v822 = vpop.f32.mrb[0].mxu0
          %v823 = vadd.f32 %v712, %v822
          %v824 = vpop.f32.mrb[0].mxu0
          %v825 = vpop.f32.mrb[0].mxu0
          %v826 = vadd.f32 %v713, %v825
          %v827 = vpop.f32.mrb[0].mxu0
          %828 = vmatprep.mubr.bf16.mxu0 0
          %829 = vmatmul.mubr.bf16.gmra.mrb[0].mxu0 %v687
          %v830 = vpop.f32.mrb[0].mxu0
          %v831 = vadd.f32 %v714, %v830
          %v832 = vpop.f32.mrb[0].mxu0
          %v833 = vpop.f32.mrb[0].mxu0
          %v834 = vadd.f32 %v715, %v833
          %v835 = vpop.f32.mrb[0].mxu0
          %836 = vmatprep.mubr.bf16.mxu0 0
          %837 = vmatmul.mubr.bf16.gmra.mrb[0].mxu0 %v688
          %v838 = vpop.f32.mrb[0].mxu0
          %v839 = vadd.f32 %v716, %v838
          %v840 = vpop.f32.mrb[0].mxu0
          %v841 = vpop.f32.mrb[0].mxu0
          %v842 = vadd.f32 %v717, %v841
          %v843 = vpop.f32.mrb[0].mxu0
          %844 = vmatprep.mubr.bf16.mxu0 0
          %845 = vmatmul.mubr.bf16.gmra.mrb[0].mxu0 %v689
          %v846 = vpop.f32.mrb[0].mxu0
          %v847 = vadd.f32 %v718, %v846
          %v848 = vpop.f32.mrb[0].mxu0
          %v849 = vpop.f32.mrb[0].mxu0
          %v850 = vadd.f32 %v719, %v849
          %v851 = vpop.f32.mrb[0].mxu0
          %852 = vmatprep.mubr.bf16.mxu0 0
          %853 = vmatmul.mubr.bf16.gmra.mrb[0].mxu0 %v690
          %v854 = vpop.f32.mrb[0].mxu0
          %v855 = vadd.f32 %v720, %v854
          %v856 = vpop.f32.mrb[0].mxu0
          %v857 = vpop.f32.mrb[0].mxu0
          %v858 = vadd.f32 %v721, %v857
          %v859 = vpop.f32.mrb[0].mxu0
          %860 = vmatprep.mubr.bf16.mxu0 0
          %861 = vmatmul.mubr.bf16.gmra.mrb[0].mxu0 %v691
          %v862 = vpop.f32.mrb[0].mxu0
          %v863 = vadd.f32 %v722, %v862
          %v864 = vpop.f32.mrb[0].mxu0
          %v865 = vpop.f32.mrb[0].mxu0
          %v866 = vadd.f32 %v723, %v865
          %v867 = vpop.f32.mrb[0].mxu0
          %868 = vdwg.mxu0
          %869 = vst [vmem:[%s297] sm:$0xff] %v807
          %870 = vst [vmem:[%s297 + $0x8] sm:$0xff] %v810
          %871 = vst [vmem:[%s297 + $0x10] sm:$0xff] %v815
          %872 = vst [vmem:[%s297 + $0x18] sm:$0xff] %v818
          %873 = vst [vmem:[%s297 + $0x20] sm:$0xff] %v823
          %874 = vst [vmem:[%s297 + $0x28] sm:$0xff] %v826
          %875 = vst [vmem:[%s297 + $0x30] sm:$0xff] %v831
          %876 = vst [vmem:[%s297 + $0x38] sm:$0xff] %v834
          %877 = vst [vmem:[%s297 + $0x40] sm:$0xff] %v839
          %878 = vst [vmem:[%s297 + $0x48] sm:$0xff] %v842
          %879 = vst [vmem:[%s297 + $0x50] sm:$0xff] %v847
          %880 = vst [vmem:[%s297 + $0x58] sm:$0xff] %v850
          %881 = vst [vmem:[%s297 + $0x60] sm:$0xff] %v855
          %882 = vst [vmem:[%s297 + $0x68] sm:$0xff] %v858
          %883 = vst [vmem:[%s297 + $0x70] sm:$0xff] %v863
          %884 = vst [vmem:[%s297 + $0x78] sm:$0xff] %v866
        $region60: #{tpu_custom_call.1} parent=35 // pred_fallthru
          _
        %s885 = sand.u32 %s138, 1
        %s886 = scalar_lea.sflag [#allocation5], %s885
        %s887 = sand.u32 %s138, 1
        %s888 = smul.addr %s887, 128
        %s889 = scalar_lea.vmem [#allocation10], %s888
        // Predicated region
        $region61: #{tpu_custom_call.1} parent=35 // pred_check
          %p890 = pneg %p148
        $region62: #{tpu_custom_call.1} parent=35 // pred_check_branch
          %892 = sbr.rel (%p890) target = $region64
        $region63: #{tpu_custom_call.1} parent=35 // pred_region
          %s893 = smul.u32 16, %s26
          %s895 = ssub.s32 2048, 2048
          %896 = vsyncadd %s886, %s895
          %s897 = smul.addr %s893, 128
          %s898 = scalar_lea.hbm %s4, %s897
          %s899 = sshll.u32 %s889, 4
          %s900 = int_to_ptr.vmem [resolvable:$true] %s899
          %905 = dma.vmem_to_hbm [thread:$0]  %s900, 2048, %s898, %s886, 128, 128, 8
        $region64: #{tpu_custom_call.1} parent=35 // pred_fallthru
          _
      $region36: #{tpu_custom_call.1} parent=5 // pred_fallthru
        _
      %p906 = scmp.le.s32.totalorder 2, %s17
      // Predicated region
      $region65: #{tpu_custom_call.1} parent=5 // pred_check
        %p907 = pneg %p906
      $region66: #{tpu_custom_call.1} parent=5 // pred_check_branch
        %909 = sbr.rel (%p907) target = $region68
      $region67: #{tpu_custom_call.1} parent=5 // pred_region
        %s910 = ssub.s32 %s17, 2
        // Predicated region
        $region69: #{tpu_custom_call.1} parent=67 // pred_check
          %p911 = pneg %p154
        $region70: #{tpu_custom_call.1} parent=67 // pred_check_branch
          %913 = sbr.rel (%p911) target = $region72
        $region71: #{tpu_custom_call.1} parent=67 // pred_region
          %s914 = sand.u32 %s139, 1
          %s915 = scalar_lea.sflag [#allocation5], %s914
          %s916 = sand.u32 %s139, 1
          %s917 = smul.addr %s916, 128
          %s918 = scalar_lea.vmem [#allocation10], %s917
          %919 = dma.done %s915, 2048
        $region72: #{tpu_custom_call.1} parent=67 // pred_fallthru
          _
      $region68: #{tpu_custom_call.1} parent=5 // pred_fallthru
        _
    $region6: #{tpu_custom_call.1} parent=1 // loop_footer
      %s21 = sadd.s32 1, %s17
    $region7: #{tpu_custom_call.1} parent=1 // loop_footer_branch
      %16 = sbr.rel target = $region3
    $region8: #{tpu_custom_call.1} parent=1 // loop_exit
      _
    %920 = vsyncpa [#allocation4], 1
    %s921 = scalar_lea.sflag [#allocation4], 1
    %922 = vsyncpa %s921, 1
    %923 = vsyncpa [#allocation7], 1
    %924 = vsyncpa [#allocation5], 1
    %s925 = scalar_lea.sflag [#allocation5], 1
    %926 = vsyncpa %s925, 1

</llo_original>
